<compile_context>
chip_gen: v7x
topology: tpu7x:2x2x1
jax: 0.10.0
libtpu: 0.0.40
codegen_flags: <defaults>
</compile_context>

<pallas_src>
import functools

import jax
import jax.numpy as jnp
from jax.experimental import pallas as pl
from jax.experimental.pallas import tpu as pltpu


def _round_up(x, m):
    return ((x + m - 1) // m) * m


def _vmem_capacity_bytes():
    """Physical per-core VMEM; conservative (v7x-sized) fallback if unknown."""
    try:
        info = pltpu.get_tpu_info()
        cap = getattr(info, "vmem_capacity_bytes", None)
        if cap:
            return int(cap)
    except Exception:
        pass
    return 64 << 20


def _pick_tm(M, H, vmem_cap):
    if M <= 256:
        return M  # single full-extent row block (always layout-legal)
    small_vmem = vmem_cap <= (64 << 20)  # v7x-class
    if small_vmem:
        tm = 256 if H >= 2048 else 512
    else:
        tm = 1024 if H <= 1024 else 512  # v5e/v6e have the 128 MiB headroom
    # Feed both TensorCores on v7x: keep at least 2 row tiles when possible.
    while tm > 256 and -(-M // tm) < 2:
        tm //= 2
    return tm


def _block_spec(shape, index_map, buffered=None):
    """BlockSpec with optional pipeline depth; degrades gracefully if the
    installed JAX's BlockSpec does not accept pipeline_mode."""
    if buffered is not None:
        try:
            return pl.BlockSpec(shape, index_map,
                                pipeline_mode=pl.Buffered(buffered))
        except TypeError:
            pass
    return pl.BlockSpec(shape, index_map)


def _custom_output_kernel(x_ref, w_ref, b_ref, res_ref, g_ref, beta_ref,
                          o_ref, acc_ref, *, eps):
    k = pl.program_id(1)

    @pl.when(k == 0)
    def _():
        # Fold the bias into the accumulator init (saves a VPU pass later).
        acc_ref[...] = jnp.broadcast_to(b_ref[...], acc_ref.shape)

    # Linear: (tm, tk) @ (tk, H) on the MXU, bf16 operands, f32 accumulation.
    acc_ref[...] += jnp.dot(x_ref[...], w_ref[...],
                            preferred_element_type=jnp.float32)

    @pl.when(k == pl.num_programs(1) - 1)
    def _():
        # TODO(synk): Dropout omitted (module runs in inference mode); for
        # training-mode dropout use pltpu.prng_seed + pltpu.prng_random_bits.
        y = acc_ref[...] + res_ref[...].astype(jnp.float32)   # residual add

        # LayerNorm over the last (lane) axis in f32; rsqrt goes to the EUP.
        mean = jnp.mean(y, axis=-1, keepdims=True)
        cent = y - mean
        var = jnp.mean(cent * cent, axis=-1, keepdims=True)
        norm = cent * jax.lax.rsqrt(var + eps)
        o_ref[...] = (norm * g_ref[...] + beta_ref[...]).astype(o_ref.dtype)


def custom_output(hidden_states, input_tensor, weight, bias, gamma, beta,
                  *, eps=1e-12, tm=None, tk=None,
                  compute_dtype=jnp.bfloat16):
    """hidden_states: (B, S, I), input_tensor: (B, S, H).
    weight: (I, H), bias/gamma/beta: (H,). Returns (B, S, H)."""
    B, S, I = hidden_states.shape
    H = input_tensor.shape[-1]
    M = B * S
    out_dtype = hidden_states.dtype
    c_item = jnp.dtype(compute_dtype).itemsize
    vmem_cap = _vmem_capacity_bytes()

    # ---- row tiling: no M padding, ragged final block handled by Pallas -----
    if tm is None:
        tm = _pick_tm(M, H, vmem_cap)
    if tm >= M:
        tm = M                        # full-extent block, always legal
    else:
        tm = max(16, _round_up(tm, 16))   # bf16 packs 16 rows / vreg
    num_row_tiles = pl.cdiv(M, tm)

    # ---- K tiling: byte-based weight-tile budget -----------------------------
    weight_budget = 12 << 20          # bytes of VMEM we allow the weight buffers
    if tk is None:
        if I * H * c_item <= weight_budget:
            tk = I                    # weight resident (single buffer)
        else:
            max_tk = max(128, ((weight_budget // (2 * H * c_item)) // 128) * 128)
            tk = None
            for cand in (2048, 1024, 512, 256, 128):
                if cand <= max_tk and I % cand == 0:
                    tk = cand
                    break
            if tk is None:
                tk = max(128, min(max_tk, 512))
    if tk >= I:
        tk = I
        I_pad = I
    else:
        tk = max(128, (tk // 128) * 128)
        I_pad = _round_up(I, tk)
    k_steps = I_pad // tk

    # ---- operand prep (bf16 matmul operands; params in f32) ------------------
    x2 = hidden_states.reshape(M, I).astype(compute_dtype)
    w2 = weight.astype(compute_dtype)
    if I_pad != I:                    # only the reduction dim ever gets padded
        x2 = jnp.pad(x2, ((0, 0), (0, I_pad - I)))
        w2 = jnp.pad(w2, ((0, I_pad - I), (0, 0)))
    r2 = input_tensor.reshape(M, H)   # keep model dtype on the DMA path
    b2 = bias.reshape(1, H).astype(jnp.float32)
    g2 = gamma.reshape(1, H).astype(jnp.float32)
    be2 = beta.reshape(1, H).astype(jnp.float32)

    # ---- explicit VMEM budget -------------------------------------------------
    w_bufs = 1 if k_steps == 1 else 2
    vmem_bytes = (
        2 * tm * tk * c_item                          # x tiles (double-buffered)
        + w_bufs * tk * H * c_item                    # weight tile(s)
        + 2 * tm * H * r2.dtype.itemsize              # residual tiles
        + 2 * tm * H * jnp.dtype(out_dtype).itemsize  # output tiles
        + tm * H * 4                                  # f32 accumulator scratch
        + 3 * H * 4                                   # bias / gamma / beta
    )
    vmem_limit = int(min(max(vmem_bytes * 1.25 + (4 << 20), 16 << 20),
                         vmem_cap * 0.75))

    # ---- cost estimate for the XLA scheduler ----------------------------------
    bytes_accessed = int(
        M * I_pad * c_item
        + num_row_tiles * I_pad * H * c_item
        + M * H * (r2.dtype.itemsize + jnp.dtype(out_dtype).itemsize)
        + 3 * H * 4)
    cost = pl.CostEstimate(flops=2 * M * I * H,
                           transcendentals=M,
                           bytes_accessed=bytes_accessed)

    grid = (num_row_tiles, k_steps)

    out = pl.pallas_call(
        functools.partial(_custom_output_kernel, eps=eps),
        out_shape=jax.ShapeDtypeStruct((M, H), out_dtype),
        grid_spec=pltpu.PrefetchScalarGridSpec(
            num_scalar_prefetch=0,
            grid=grid,
            in_specs=[
                pl.BlockSpec((tm, tk), lambda i, k: (i, k)),        # activations
                _block_spec((tk, H), lambda i, k: (k, 0),           # weight
                            buffered=1 if k_steps == 1 else None),
                _block_spec((1, H), lambda i, k: (0, 0), buffered=1),  # bias
                pl.BlockSpec((tm, H), lambda i, k: (i, 0)),         # residual
                _block_spec((1, H), lambda i, k: (0, 0), buffered=1),  # gamma
                _block_spec((1, H), lambda i, k: (0, 0), buffered=1),  # beta
            ],
            out_specs=pl.BlockSpec((tm, H), lambda i, k: (i, 0)),
            scratch_shapes=[pltpu.VMEM((tm, H), jnp.float32)],
        ),
        compiler_params=pltpu.CompilerParams(
            dimension_semantics=("parallel", "arbitrary"),
            vmem_limit_bytes=vmem_limit,
        ),
        cost_estimate=cost,
    )(x2, w2, b2, r2, g2, be2)

    return out.reshape(B, S, H)


def reference(hidden_states, input_tensor, weight, bias, gamma, beta, eps=1e-12):
    h = jnp.einsum("bsi,ih->bsh", hidden_states, weight,
                   preferred_element_type=jnp.float32) + bias
    y = h + input_tensor
    mean = jnp.mean(y, axis=-1, keepdims=True)
    var = jnp.mean((y - mean) ** 2, axis=-1, keepdims=True)
    return (y - mean) * jax.lax.rsqrt(var + eps) * gamma + beta


if __name__ == "__main__":
    # Small config: batch=2, seq=8, intermediate_size=64, hidden_size=32
    B, S, INTER, HID = 2, 8, 64, 32
    eps = 1e-12

    key = jax.random.PRNGKey(0)
    k1, k2, k3, k4 = jax.random.split(key, 4)

    hidden_states = jax.random.normal(k1, (B, S, INTER), dtype=jnp.float32)
    input_tensor = jax.random.normal(k2, (B, S, HID), dtype=jnp.float32)

    # Deterministic parameter init (synthetic; mimics nn.Linear / nn.LayerNorm).
    weight = jax.random.normal(k3, (INTER, HID), dtype=jnp.float32) * 0.02
    bias = jax.random.normal(k4, (HID,), dtype=jnp.float32) * 0.02
    gamma = jnp.ones((HID,), dtype=jnp.float32)
    beta = jnp.zeros((HID,), dtype=jnp.float32)

    out = custom_output(hidden_states, input_tensor, weight, bias, gamma, beta,
                        eps=eps)
    out = jax.block_until_ready(out)

    # Compare against an f32 reference fed the same bf16-rounded matmul
    # operands (the kernel intentionally computes the matmul in bf16).
    hs_bf = hidden_states.astype(jnp.bfloat16).astype(jnp.float32)
    w_bf = weight.astype(jnp.bfloat16).astype(jnp.float32)
    ref = reference(hs_bf, input_tensor, w_bf, bias, gamma, beta, eps)

    assert out.shape == (B, S, HID)
    assert jnp.allclose(out, ref, atol=1e-3, rtol=1e-3), "mismatch vs reference"

    print("KERNEL_OK")
</pallas_src>

<mosaic_0001>
module attributes {stable_mosaic.version = 11 : i64} {
  func.func @_custom_output_kernel(%arg0: i32, %arg1: i32, %arg2: memref<16x64xbf16, #tpu.memory_space<vmem>>, %arg3: memref<64x32xbf16, #tpu.memory_space<vmem>>, %arg4: memref<1x32xf32, #tpu.memory_space<vmem>>, %arg5: memref<16x32xf32, #tpu.memory_space<vmem>>, %arg6: memref<1x32xf32, #tpu.memory_space<vmem>>, %arg7: memref<1x32xf32, #tpu.memory_space<vmem>>, %arg8: memref<16x32xf32, #tpu.memory_space<vmem>>, %arg9: memref<16x32xf32, #tpu.memory_space<vmem>>) attributes {dimension_semantics = [#tpu.dimension_semantics<parallel>, #tpu.dimension_semantics<arbitrary>], iteration_bounds = array<i64: 1, 1>, scalar_prefetch = 0 : i64, scratch_operands = 1 : i64, tpu.core_type = #tpu.core_type<tc>, window_params = [{transform_indices = @transform_0, window_bounds = array<i64: 16, 64>}, {pipeline_mode = #tpu.pipeline_mode<synchronous>, transform_indices = @transform_1, window_bounds = array<i64: 64, 32>}, {pipeline_mode = #tpu.pipeline_mode<synchronous>, transform_indices = @transform_2, window_bounds = array<i64: 1, 32>}, {transform_indices = @transform_3, window_bounds = array<i64: 16, 32>}, {pipeline_mode = #tpu.pipeline_mode<synchronous>, transform_indices = @transform_4, window_bounds = array<i64: 1, 32>}, {pipeline_mode = #tpu.pipeline_mode<synchronous>, transform_indices = @transform_5, window_bounds = array<i64: 1, 32>}, {transform_indices = @transform_6, window_bounds = array<i64: 16, 32>}]} {
    %c0_i32 = arith.constant 0 : i32
    %0 = arith.cmpi eq, %arg1, %c0_i32 : i32
    %1 = arith.extui %0 : i1 to i32
    %c0_i32_0 = arith.constant 0 : i32
    %2 = arith.cmpi ne, %1, %c0_i32_0 : i32
    scf.if %2 {
      %c0_10 = arith.constant 0 : index
      %c0_11 = arith.constant 0 : index
      %12 = vector.load %arg4[%c0_10, %c0_11] : memref<1x32xf32, #tpu.memory_space<vmem>>, vector<1x32xf32>
      %13 = vector.shape_cast %12 : vector<1x32xf32> to vector<1x32xf32>
      %14 = vector.broadcast %13 : vector<1x32xf32> to vector<16x32xf32>
      %c0_12 = arith.constant 0 : index
      %c0_13 = arith.constant 0 : index
      %15 = vector.load %arg9[%c0_12, %c0_13] : memref<16x32xf32, #tpu.memory_space<vmem>>, vector<16x32xf32>
      tpu.vector_store %arg9[%c0_12, %c0_13], %14 {strides = array<i32>} : memref<16x32xf32, #tpu.memory_space<vmem>>, vector<16x32xf32>,
    } else {
    }
    %c0 = arith.constant 0 : index
    %c0_1 = arith.constant 0 : index
    %3 = vector.load %arg9[%c0, %c0_1] : memref<16x32xf32, #tpu.memory_space<vmem>>, vector<16x32xf32>
    %c0_2 = arith.constant 0 : index
    %c0_3 = arith.constant 0 : index
    %4 = vector.load %arg2[%c0_2, %c0_3] : memref<16x64xbf16, #tpu.memory_space<vmem>>, vector<16x64xbf16>
    %c0_4 = arith.constant 0 : index
    %c0_5 = arith.constant 0 : index
    %5 = vector.load %arg3[%c0_4, %c0_5] : memref<64x32xbf16, #tpu.memory_space<vmem>>, vector<64x32xbf16>
    %cst = arith.constant dense<0.000000e+00> : vector<16x32xf32>
    %6 = tpu.matmul %4, %5, %cst {dimension_numbers = #tpu.dot_dimension_numbers<[1], [0], [0], [1], [0, 0, 1, 1], [], []>} : vector<16x64xbf16>, vector<64x32xbf16>, vector<16x32xf32> -> vector<16x32xf32>
    %7 = arith.addf %3, %6 : vector<16x32xf32>
    %c0_6 = arith.constant 0 : index
    %c0_7 = arith.constant 0 : index
    %8 = vector.load %arg9[%c0_6, %c0_7] : memref<16x32xf32, #tpu.memory_space<vmem>>, vector<16x32xf32>
    tpu.vector_store %arg9[%c0_6, %c0_7], %7 {strides = array<i32>} : memref<16x32xf32, #tpu.memory_space<vmem>>, vector<16x32xf32>,
    %c0_i32_8 = arith.constant 0 : i32
    %9 = arith.cmpi eq, %arg1, %c0_i32_8 : i32
    %10 = arith.extui %9 : i1 to i32
    %c0_i32_9 = arith.constant 0 : i32
    %11 = arith.cmpi ne, %10, %c0_i32_9 : i32
    scf.if %11 {
      %c0_10 = arith.constant 0 : index
      %c0_11 = arith.constant 0 : index
      %12 = vector.load %arg9[%c0_10, %c0_11] : memref<16x32xf32, #tpu.memory_space<vmem>>, vector<16x32xf32>
      %c0_12 = arith.constant 0 : index
      %c0_13 = arith.constant 0 : index
      %13 = vector.load %arg5[%c0_12, %c0_13] : memref<16x32xf32, #tpu.memory_space<vmem>>, vector<16x32xf32>
      %14 = arith.addf %12, %13 : vector<16x32xf32>
      %cst_14 = arith.constant dense<0.000000e+00> : vector<16xf32>
      %15 = vector.multi_reduction <add>, %14, %cst_14 [1] : vector<16x32xf32> to vector<16xf32>
      %16 = vector.shape_cast %15 : vector<16xf32> to vector<16x1xf32>
      %cst_15 = arith.constant 3.200000e+01 : f32
      %17 = vector.broadcast %cst_15 : f32 to vector<16x1xf32>
      %18 = arith.divf %16, %17 : vector<16x1xf32>
      %19 = vector.broadcast %18 : vector<16x1xf32> to vector<16x32xf32>
      %20 = arith.subf %14, %19 : vector<16x32xf32>
      %21 = arith.mulf %20, %20 : vector<16x32xf32>
      %cst_16 = arith.constant dense<0.000000e+00> : vector<16xf32>
      %22 = vector.multi_reduction <add>, %21, %cst_16 [1] : vector<16x32xf32> to vector<16xf32>
      %23 = vector.shape_cast %22 : vector<16xf32> to vector<16x1xf32>
      %cst_17 = arith.constant 3.200000e+01 : f32
      %24 = vector.broadcast %cst_17 : f32 to vector<16x1xf32>
      %25 = arith.divf %23, %24 : vector<16x1xf32>
      %cst_18 = arith.constant 9.99999996E-13 : f32
      %26 = vector.broadcast %cst_18 : f32 to vector<16x1xf32>
      %27 = arith.addf %25, %26 : vector<16x1xf32>
      %28 = math.rsqrt %27 : vector<16x1xf32>
      %29 = vector.broadcast %28 : vector<16x1xf32> to vector<16x32xf32>
      %30 = arith.mulf %20, %29 : vector<16x32xf32>
      %c0_19 = arith.constant 0 : index
      %c0_20 = arith.constant 0 : index
      %31 = vector.load %arg6[%c0_19, %c0_20] : memref<1x32xf32, #tpu.memory_space<vmem>>, vector<1x32xf32>
      %32 = vector.broadcast %31 : vector<1x32xf32> to vector<16x32xf32>
      %33 = arith.mulf %30, %32 : vector<16x32xf32>
      %c0_21 = arith.constant 0 : index
      %c0_22 = arith.constant 0 : index
      %34 = vector.load %arg7[%c0_21, %c0_22] : memref<1x32xf32, #tpu.memory_space<vmem>>, vector<1x32xf32>
      %35 = vector.broadcast %34 : vector<1x32xf32> to vector<16x32xf32>
      %36 = arith.addf %33, %35 : vector<16x32xf32>
      %c0_23 = arith.constant 0 : index
      %c0_24 = arith.constant 0 : index
      %37 = vector.load %arg8[%c0_23, %c0_24] : memref<16x32xf32, #tpu.memory_space<vmem>>, vector<16x32xf32>
      tpu.vector_store %arg8[%c0_23, %c0_24], %36 {strides = array<i32>} : memref<16x32xf32, #tpu.memory_space<vmem>>, vector<16x32xf32>,
    } else {
    }
    return
  }
  func.func @transform_0(%arg0: i32, %arg1: i32) -> (i32, i32) {
    %c0_i32 = arith.constant 0 : i32
    return %arg0, %arg1 : i32, i32
  }
  func.func @transform_1(%arg0: i32, %arg1: i32) -> (i32, i32) {
    %c0_i32 = arith.constant 0 : i32
    %c0_i32_0 = arith.constant 0 : i32
    return %arg1, %c0_i32 : i32, i32
  }
  func.func @transform_2(%arg0: i32, %arg1: i32) -> (i32, i32) {
    %c0_i32 = arith.constant 0 : i32
    %c0_i32_0 = arith.constant 0 : i32
    %c0_i32_1 = arith.constant 0 : i32
    return %c0_i32, %c0_i32_0 : i32, i32
  }
  func.func @transform_3(%arg0: i32, %arg1: i32) -> (i32, i32) {
    %c0_i32 = arith.constant 0 : i32
    %c0_i32_0 = arith.constant 0 : i32
    return %arg0, %c0_i32 : i32, i32
  }
  func.func @transform_4(%arg0: i32, %arg1: i32) -> (i32, i32) {
    %c0_i32 = arith.constant 0 : i32
    %c0_i32_0 = arith.constant 0 : i32
    %c0_i32_1 = arith.constant 0 : i32
    return %c0_i32, %c0_i32_0 : i32, i32
  }
  func.func @transform_5(%arg0: i32, %arg1: i32) -> (i32, i32) {
    %c0_i32 = arith.constant 0 : i32
    %c0_i32_0 = arith.constant 0 : i32
    %c0_i32_1 = arith.constant 0 : i32
    return %c0_i32, %c0_i32_0 : i32, i32
  }
  func.func @transform_6(%arg0: i32, %arg1: i32) -> (i32, i32) {
    %c0_i32 = arith.constant 0 : i32
    %c0_i32_0 = arith.constant 0 : i32
    return %arg0, %c0_i32 : i32, i32
  }
}

</mosaic_0001>

<llo_original>
// kernel: tpu_custom_call.1
$region0: #{tpu_custom_call.1}
  #allocation0 [shape = 'u32[]', space=smem, size = 0x4, offset = 0x4, fixed_abs, tag = 'smem constant byte address 0x4 - core index']
  #allocation1 [shape = 'u32[144,128]{1,0:T(1,128)}', space=vmem, size = 0x12000, scoped, tag = 'internal scratch']
  #allocation2 [shape = 'f32[16,32]{1,0:T(8,128)}', space=vmem, size = 0x2000, scoped, tag = 'scratch operand']
  %s0 = inlined_call_operand.vmem [shape: bf16[16,64], index: 0, kind: input, shape index: {}]
  %s1 = inlined_call_operand.vmem [shape: bf16[64,32], index: 1, kind: input, shape index: {}]
  %s2 = inlined_call_operand.vmem [shape: f32[1,32], index: 2, kind: input, shape index: {}]
  %s3 = inlined_call_operand.vmem [shape: f32[16,32], index: 3, kind: input, shape index: {}]
  %s4 = inlined_call_operand.vmem [shape: f32[1,32], index: 4, kind: input, shape index: {}]
  %s5 = inlined_call_operand.vmem [shape: f32[1,32], index: 5, kind: input, shape index: {}]
  %s6 = inlined_call_operand.hbm [shape: f32[16,32], index: 6, kind: output, shape index: {}]
  %s7 = sld [smem:[#allocation0]]
  $region42: #{tpu_custom_call.1} parent=0
    _
  %s9 = ssub.s32 1, %s7
  %s10 = scalar_select 0, %s9, %s7
  $region1: #{tpu_custom_call.1} parent=0
    #allocation3 [shape = 'u8[8192]{0}', space=vmem, size = 0x2000, scoped, tag = 'output window, operand 0, single buffered']
    #allocation4 [shape = 's32[1]{0}', space=sflag, size = 0x4, scoped, tag = 'scoped memory for tpu_custom_call.1']
    %11 = vsyncpa [#allocation4], 0
    // Predicated region
    $region2: #{tpu_custom_call.1} parent=1 // pred_check
      _
    $region3: #{tpu_custom_call.1} parent=1 // pred_check_branch
      %13 = sbr.rel (0) target = $region5
    $region4: #{tpu_custom_call.1} parent=1 // pred_region
      _
    $region5: #{tpu_custom_call.1} parent=1 // pred_fallthru
      _
    // Predicated region
    $region6: #{tpu_custom_call.1} parent=1 // pred_check
      _
    $region7: #{tpu_custom_call.1} parent=1 // pred_check_branch
      %15 = sbr.rel (0) target = $region9
    $region8: #{tpu_custom_call.1} parent=1 // pred_region
      _
    $region9: #{tpu_custom_call.1} parent=1 // pred_fallthru
      _
    // Predicated region
    $region10: #{tpu_custom_call.1} parent=1 // pred_check
      _
    $region11: #{tpu_custom_call.1} parent=1 // pred_check_branch
      %17 = sbr.rel (0) target = $region13
    $region12: #{tpu_custom_call.1} parent=1 // pred_region
      _
    $region13: #{tpu_custom_call.1} parent=1 // pred_fallthru
      _
    // Predicated region
    $region14: #{tpu_custom_call.1} parent=1 // pred_check
      _
    $region15: #{tpu_custom_call.1} parent=1 // pred_check_branch
      %19 = sbr.rel (0) target = $region17
    $region16: #{tpu_custom_call.1} parent=1 // pred_region
      _
    $region17: #{tpu_custom_call.1} parent=1 // pred_fallthru
      _
    // Predicated region
    $region18: #{tpu_custom_call.1} parent=1 // pred_check
      _
    $region19: #{tpu_custom_call.1} parent=1 // pred_check_branch
      %21 = sbr.rel (0) target = $region21
    $region20: #{tpu_custom_call.1} parent=1 // pred_region
      _
    $region21: #{tpu_custom_call.1} parent=1 // pred_fallthru
      _
    // Predicated region
    $region22: #{tpu_custom_call.1} parent=1 // pred_check
      _
    $region23: #{tpu_custom_call.1} parent=1 // pred_check_branch
      %23 = sbr.rel (0) target = $region25
    $region24: #{tpu_custom_call.1} parent=1 // pred_region
      _
    $region25: #{tpu_custom_call.1} parent=1 // pred_fallthru
      _
    %p25 = scmp.eq.s32.totalorder 0, 0
    // Predicated region
    $region26: #{tpu_custom_call.1} parent=1 // pred_check
      %p26 = pneg %p25
    $region27: #{tpu_custom_call.1} parent=1 // pred_check_branch
      %28 = sbr.rel (%p26) target = $region29
    $region28: #{tpu_custom_call.1} parent=1 // pred_region
      %v29 = vld [vmem:[%s2] sm:$0x1]
      %v31 = vlaneseq
      %v32 = vshrl.u32 %v31, 7
      %v33 = vsub.s32 0, %v32
      %v34 = vrot.slane %v29, %v33
      %vm36 = vcmask 261120
      %37 = vst.msk [vmem:[#allocation2] sm:$0xff] %vm36, %v34
      %38 = vst.msk [vmem:[#allocation2 + $0x8] sm:$0xff] %vm36, %v34
    $region29: #{tpu_custom_call.1} parent=1 // pred_fallthru
      _
    %v39 = vld [vmem:[#allocation2] sm:$0xff]
    %v40 = vld [vmem:[#allocation2 + $0x8] sm:$0xff]
    %v41 = vld [vmem:[%s0] sm:$0xf]
    %v42 = vld [vmem:[%s0 + $0x4] sm:$0xf]
    %v43 = vld [vmem:[%s1] sm:$0xf]
    %v44 = vld [vmem:[%s1 + $0x4] sm:$0xf]
    %v45 = vld [vmem:[%s1 + $0x8] sm:$0xf]
    %v46 = vld [vmem:[%s1 + $0xc] sm:$0xf]
    %v47 = vld [vmem:[%s1 + $0x10] sm:$0xf]
    %v48 = vld [vmem:[%s1 + $0x14] sm:$0xf]
    %v49 = vld [vmem:[%s1 + $0x18] sm:$0xf]
    %v50 = vld [vmem:[%s1 + $0x1c] sm:$0xf]
    %v53 = vunpack.c.l.b16 %v41
    %v54 = vunpack.c.l.b16 %v42
    %v55 = vpack.c.b16 %v54, %v53
    %v64 = vunpack.c.l.b16 %v43
    %v65 = vunpack.c.l.b16 %v44
    %v66 = vunpack.c.l.b16 %v45
    %v67 = vunpack.c.l.b16 %v46
    %v68 = vunpack.c.l.b16 %v47
    %v69 = vunpack.c.l.b16 %v48
    %v70 = vunpack.c.l.b16 %v49
    %v71 = vunpack.c.l.b16 %v50
    %v72 = vpack.c.b16 %v65, %v64
    %v73 = vpack.c.b16 %v67, %v66
    %v74 = vpack.c.b16 %v69, %v68
    %v75 = vpack.c.b16 %v71, %v70
    %vm80 = vcmask 523264
    %v82 = vsel %vm80, %v55, 0
    %84 = vmatprep.subr.bf16.mxu0 0
    %85 = vmatpush1.bf16.msra.mxu0 %v72
    %86 = vmatprep.subr.bf16.mxu0 0
    %87 = vmatpush1.bf16.msra.mxu0 %v73
    %88 = vmatprep.subr.bf16.mxu0 0
    %89 = vmatpush1.bf16.msra.mxu0 %v74
    %90 = vmatprep.subr.bf16.mxu0 0
    %91 = vmatpush1.bf16.msra.mxu0 %v75
    %92 = vmatprep.subr.bf16.mxu0 0
    %93 = vmatpush1.bf16.msra.mxu0 0
    %94 = vmatprep.subr.bf16.mxu0 0
    %95 = vmatpush1.bf16.msra.mxu0 0
    %96 = vmatprep.subr.bf16.mxu0 0
    %97 = vmatpush1.bf16.msra.mxu0 0
    %98 = vmatprep.subr.bf16.mxu0 0
    %99 = vmatpush1.bf16.msra.mxu0 0
    %100 = vmatprep.subr.bf16.mxu0 0
    %101 = vmatpush1.bf16.msra.mxu0 0
    %102 = vmatprep.subr.bf16.mxu0 0
    %103 = vmatpush1.bf16.msra.mxu0 0
    %104 = vmatprep.subr.bf16.mxu0 0
    %105 = vmatpush1.bf16.msra.mxu0 0
    %106 = vmatprep.subr.bf16.mxu0 0
    %107 = vmatpush1.bf16.msra.mxu0 0
    %108 = vmatprep.subr.bf16.mxu0 0
    %109 = vmatpush1.bf16.msra.mxu0 0
    %110 = vmatprep.subr.bf16.mxu0 0
    %111 = vmatpush1.bf16.msra.mxu0 0
    %112 = vmatprep.subr.bf16.mxu0 0
    %113 = vmatpush1.bf16.msra.mxu0 0
    %114 = vmatprep.subr.bf16.mxu0 0
    %115 = vmatpush1.bf16.msra.mxu0 0
    %116 = vmatprep.mubr.bf16.mxu0 0
    %117 = vmatmul.mubr.bf16.gmra.mrb[0].mxu0 %v82
    %v118 = vpop.f32.mrb[0].mxu0
    %v119 = vadd.f32 0.0, %v118
    %v120 = vpop.f32.mrb[0].mxu0
    %v121 = vpop.f32.mrb[0].mxu0
    %v122 = vadd.f32 0.0, %v121
    %v123 = vpop.f32.mrb[0].mxu0
    %124 = vdwg.mxu0
    %v125 = vadd.f32 %v39, %v119
    %v126 = vadd.f32 %v40, %v122
    %vm127 = vcmask 261120
    %128 = vst.msk [vmem:[#allocation2] sm:$0xff] %vm127, %v125
    %129 = vst.msk [vmem:[#allocation2 + $0x8] sm:$0xff] %vm127, %v126
    // Predicated region
    $region30: #{tpu_custom_call.1} parent=1 // pred_check
      %p130 = pneg %p25
    $region31: #{tpu_custom_call.1} parent=1 // pred_check_branch
      %132 = sbr.rel (%p130) target = $region33
    $region32: #{tpu_custom_call.1} parent=1 // pred_region
      %v133 = vld [vmem:[#allocation2] sm:$0xff]
      %v134 = vld [vmem:[#allocation2 + $0x8] sm:$0xff]
      %v135 = vld [vmem:[%s3] sm:$0xff]
      %v136 = vld [vmem:[%s3 + $0x8] sm:$0xff]
      %v137 = vadd.f32 %v133, %v135
      %v138 = vadd.f32 %v134, %v136
      %v139 = vsel %vm127, %v137, 0.0
      %140 = vadd.xlane.f32.xlu0 %v139
      %v141 = vpop.xlane.xlu0 %140
      %v142 = vsel %vm127, %v138, 0.0
      %143 = vadd.xlane.f32.xlu0 %v142
      %v144 = vpop.xlane.xlu0 %143
      %v145 = vrcp.pop 32.0
      %v146 = vmul.f32 %v141, %v145
      %v147 = vmul.f32 %v144, %v145
      %v148 = vsub.f32 %v137, %v146
      %v149 = vsub.f32 %v138, %v147
      %v150 = vmul.f32 %v148, %v148
      %v151 = vmul.f32 %v149, %v149
      %v152 = vsel %vm127, %v150, 0.0
      %153 = vadd.xlane.f32.xlu0 %v152
      %v154 = vpop.xlane.xlu0 %153
      %v155 = vsel %vm127, %v151, 0.0
      %156 = vadd.xlane.f32.xlu0 %v155
      %v157 = vpop.xlane.xlu0 %156
      %v158 = vmul.f32 %v154, %v145
      %v159 = vmul.f32 %v157, %v145
      %v160 = vadd.f32 %v158, 1e-12
      %v161 = vadd.f32 %v159, 1e-12
      %v162 = vrsqrt.pop %v160
      %v163 = vrsqrt.pop %v161
      %v164 = vmul.f32 %v148, %v162
      %v165 = vmul.f32 %v149, %v163
      %v166 = vld [vmem:[%s4] sm:$0x1]
      %v168 = vlaneseq
      %v169 = vshrl.u32 %v168, 7
      %v170 = vsub.s32 0, %v169
      %v171 = vrot.slane %v166, %v170
      %v173 = vmul.f32 %v164, %v171
      %v174 = vmul.f32 %v165, %v171
      %v175 = vld [vmem:[%s5] sm:$0x1]
      %v177 = vlaneseq
      %v178 = vshrl.u32 %v177, 7
      %v179 = vsub.s32 0, %v178
      %v180 = vrot.slane %v175, %v179
      %v182 = vadd.f32 %v173, %v180
      %v183 = vadd.f32 %v174, %v180
      %184 = vst.msk [vmem:[#allocation3] sm:$0xff] %vm127, %v182
      %185 = vst.msk [vmem:[#allocation3 + $0x8] sm:$0xff] %vm127, %v183
    $region33: #{tpu_custom_call.1} parent=1 // pred_fallthru
      _
    // Predicated region
    $region34: #{tpu_custom_call.1} parent=1 // pred_check
      _
    $region35: #{tpu_custom_call.1} parent=1 // pred_check_branch
      %187 = sbr.rel (0) target = $region37
    $region36: #{tpu_custom_call.1} parent=1 // pred_region
      %s189 = ssub.s32 256, 256
      %190 = vsyncadd [#allocation4], %s189
      %s191 = sshll.u32 [#allocation3], 4
      %s192 = int_to_ptr.vmem [resolvable:$true] %s191
      %197 = dma.vmem_to_hbm [thread:$0]  %s192, 256, %s6, [#allocation4], 128, 128, 8
    $region37: #{tpu_custom_call.1} parent=1 // pred_fallthru
      _
    // Predicated region
    $region38: #{tpu_custom_call.1} parent=1 // pred_check
      _
    $region39: #{tpu_custom_call.1} parent=1 // pred_check_branch
      %199 = sbr.rel (0) target = $region41
    $region40: #{tpu_custom_call.1} parent=1 // pred_region
      %200 = dma.done [#allocation4], 256
    $region41: #{tpu_custom_call.1} parent=1 // pred_fallthru
      _
    %201 = vsyncpa [#allocation4], 1

</llo_original>
